<compile_context>
chip_gen: v7x
topology: tpu7x:2x2x1
jax: 0.10.0
libtpu: 0.0.40
codegen_flags: <defaults>
</compile_context>

<pallas_src>
import functools

import jax
import jax.numpy as jnp
from jax.experimental import pallas as pl
from jax.experimental.pallas import tpu as pltpu

OUT_MM = 128    # padded N for the last matmul (lane-dense MXU, same cost as N=2)
OUT_STORE = 8   # stored output width (>= 2 logits), keeps HBM writes tiny


def _round_up(x: int, m: int) -> int:
    return ((x + m - 1) // m) * m


def domain_classifier_kernel(x_ref, w1_ref, b1_ref, w2_ref, b2_ref,
                             w3_ref, b3_ref, o_ref):
    # GradientReverse.forward == identity -> just read the batch tile.
    # Cast to bf16 in-kernel so the MXU runs at full rate (f32 accumulate).
    x = x_ref[...].astype(jnp.bfloat16)                       # (TB, in_dim)

    # Layer 1: Linear(in_dim, 256) + ReLU
    h1 = jnp.dot(x, w1_ref[...], preferred_element_type=jnp.float32)
    h1 = jnp.maximum(h1 + b1_ref[...], 0.0)

    # Layer 2: Linear(256, 128) + ReLU
    h2 = jnp.dot(h1.astype(jnp.bfloat16), w2_ref[...],
                 preferred_element_type=jnp.float32)
    h2 = jnp.maximum(h2 + b2_ref[...], 0.0)

    # Layer 3: Linear(128, 2) computed against the 128-lane padded W3 (one
    # MXU pass either way); only the first OUT_STORE lanes are stored so the
    # HBM output write stays small.  The lane slice does not cross an (8,128)
    # tile boundary -> no relayout.
    out = jnp.dot(h2.astype(jnp.bfloat16), w3_ref[...],
                  preferred_element_type=jnp.float32)         # (TB, 128)
    o_ref[...] = (out[:, :OUT_STORE] + b3_ref[...]).astype(o_ref.dtype)


@functools.partial(jax.jit, static_argnames=("block_b",))
def domain_classifier(feat, w1, b1, w2, b2, w3, b3, *, block_b=4096):
    """feat: [B, in_dim] float32 -> logits [B, 2] float32.

    block_b: batch tile size (rounded up to a multiple of 128 when tiling).
    """
    B, in_dim = feat.shape
    h1_dim = w1.shape[1]   # 256
    h2_dim = w2.shape[1]   # 128
    out_dim = w3.shape[1]  # 2

    # Batch tiling: single exact tile when B fits; otherwise lane/sublane
    # friendly tiles of a multiple of 128 rows with a zero-padded tail.
    if B <= block_b:
        tb = B
    else:
        tb = min(_round_up(block_b, 128), B)
    b_pad = _round_up(B, tb)
    grid = (b_pad // tb,)

    feat_in = feat if b_pad == B else jnp.pad(feat, ((0, b_pad - B), (0, 0)))

    w1_bf = w1.astype(jnp.bfloat16)
    w2_bf = w2.astype(jnp.bfloat16)
    # Zero-pad the 2-wide final layer to 128 output lanes for the matmul.
    w3_bf = jnp.pad(w3, ((0, 0), (0, OUT_MM - out_dim))).astype(jnp.bfloat16)
    b3_p = jnp.pad(b3, (0, OUT_STORE - out_dim)).reshape(1, OUT_STORE)

    b1_2d = b1.reshape(1, h1_dim)
    b2_2d = b2.reshape(1, h2_dim)

    # Weights/biases: same block index every grid step -> DMA'd once, resident.
    def resident(shape):
        return pl.BlockSpec(shape, lambda i: (0, 0))

    # Rough per-step VMEM footprint (double-buffered feat + intermediates).
    est_vmem = (2 * tb * in_dim * 4
                + tb * (h1_dim + h2_dim) * 6
                + 2 * (in_dim * h1_dim + h1_dim * h2_dim + h2_dim * OUT_MM)
                + 2 * tb * OUT_STORE * 4)
    vmem_limit = (64 * 1024 * 1024) if est_vmem > 14 * 1024 * 1024 else None

    compiler_params = pltpu.CompilerParams(
        dimension_semantics=("parallel",),   # lets v7x use both TensorCores
        vmem_limit_bytes=vmem_limit,
    )

    out_padded = pl.pallas_call(
        domain_classifier_kernel,
        out_shape=jax.ShapeDtypeStruct((b_pad, OUT_STORE), jnp.float32),
        grid=grid,
        in_specs=[
            pl.BlockSpec((tb, in_dim), lambda i: (i, 0)),  # feat tile (streamed)
            resident((in_dim, h1_dim)),                    # w1
            resident((1, h1_dim)),                         # b1
            resident((h1_dim, h2_dim)),                    # w2
            resident((1, h2_dim)),                         # b2
            resident((h2_dim, OUT_MM)),                    # w3 (lane-padded)
            resident((1, OUT_STORE)),                      # b3 (padded to 8)
        ],
        out_specs=pl.BlockSpec((tb, OUT_STORE), lambda i: (i, 0)),
        compiler_params=compiler_params,
    )(feat_in, w1_bf, b1_2d, w2_bf, b2_2d, w3_bf, b3_p)

    return out_padded[:B, :out_dim]


def init_params(key, in_dim=256):
    """Deterministic synthetic parameters (shapes from DomainClassifier.__init__)."""
    k1, k2, k3 = jax.random.split(key, 3)
    scale = 0.02
    w1 = scale * jax.random.normal(k1, (in_dim, 256), jnp.float32)
    b1 = 0.01 * jnp.ones((256,), jnp.float32)
    w2 = scale * jax.random.normal(k2, (256, 128), jnp.float32)
    b2 = -0.01 * jnp.ones((128,), jnp.float32)
    w3 = scale * jax.random.normal(k3, (128, 2), jnp.float32)
    b3 = 0.05 * jnp.ones((2,), jnp.float32)
    return w1, b1, w2, b2, w3, b3


def ref_forward_bf16(feat, w1, b1, w2, b2, w3, b3):
    """Plain-JAX reference with the same bf16-input / f32-accumulate math."""
    bf = jnp.bfloat16
    h1 = jnp.maximum(
        jnp.dot(feat.astype(bf), w1.astype(bf),
                preferred_element_type=jnp.float32) + b1, 0.0)
    h2 = jnp.maximum(
        jnp.dot(h1.astype(bf), w2.astype(bf),
                preferred_element_type=jnp.float32) + b2, 0.0)
    return jnp.dot(h2.astype(bf), w3.astype(bf),
                   preferred_element_type=jnp.float32) + b3


if __name__ == "__main__":
    key = jax.random.PRNGKey(0)
    k_feat, k_param = jax.random.split(key)

    B, IN_DIM = 8, 256
    feat = jax.random.normal(k_feat, (B, IN_DIM), jnp.float32)
    w1, b1, w2, b2, w3, b3 = init_params(k_param, IN_DIM)

    # 1) Small single-tile case (B=8).
    logits = domain_classifier(feat, w1, b1, w2, b2, w3, b3)
    logits = jax.block_until_ready(logits)
    assert logits.shape == (B, 2)

    ref = ref_forward_bf16(feat, w1, b1, w2, b2, w3, b3)
    assert jnp.allclose(logits, ref, atol=1e-3, rtol=1e-3)

    # Loose check against the pure-f32 PyTorch-equivalent math.
    h1f = jnp.maximum(feat @ w1 + b1, 0.0)
    h2f = jnp.maximum(h1f @ w2 + b2, 0.0)
    ref_f32 = h2f @ w3 + b3
    assert jnp.allclose(logits, ref_f32, atol=2e-2, rtol=2e-2)

    # 2) Multi-tile grid + ragged-tail padding path (B=300 with 128-row tiles).
    B2 = 300
    feat2 = jax.random.normal(jax.random.PRNGKey(1), (B2, IN_DIM), jnp.float32)
    logits2 = domain_classifier(feat2, w1, b1, w2, b2, w3, b3, block_b=128)
    logits2 = jax.block_until_ready(logits2)
    assert logits2.shape == (B2, 2)
    ref2 = ref_forward_bf16(feat2, w1, b1, w2, b2, w3, b3)
    assert jnp.allclose(logits2, ref2, atol=1e-3, rtol=1e-3)

    # TODO(synk): GradientReverse only alters the backward pass (grad * -lambd);
    # a custom_vjp would be needed for training, forward semantics are identity.
    print("KERNEL_OK")
</pallas_src>

<mosaic_0001>
module attributes {stable_mosaic.version = 11 : i64} {
  func.func @domain_classifier_kernel(%arg0: i32, %arg1: memref<8x256xf32, #tpu.memory_space<vmem>>, %arg2: memref<256x256xbf16, #tpu.memory_space<vmem>>, %arg3: memref<1x256xf32, #tpu.memory_space<vmem>>, %arg4: memref<256x128xbf16, #tpu.memory_space<vmem>>, %arg5: memref<1x128xf32, #tpu.memory_space<vmem>>, %arg6: memref<128x128xbf16, #tpu.memory_space<vmem>>, %arg7: memref<1x8xf32, #tpu.memory_space<vmem>>, %arg8: memref<8x8xf32, #tpu.memory_space<vmem>>) attributes {dimension_semantics = [#tpu.dimension_semantics<parallel>], iteration_bounds = array<i64: 1>, scalar_prefetch = 0 : i64, scratch_operands = 0 : i64, tpu.core_type = #tpu.core_type<tc>, window_params = [{transform_indices = @transform_0, window_bounds = array<i64: 8, 256>}, {pipeline_mode = #tpu.pipeline_mode<synchronous>, transform_indices = @transform_1, window_bounds = array<i64: 256, 256>}, {pipeline_mode = #tpu.pipeline_mode<synchronous>, transform_indices = @transform_2, window_bounds = array<i64: 1, 256>}, {pipeline_mode = #tpu.pipeline_mode<synchronous>, transform_indices = @transform_3, window_bounds = array<i64: 256, 128>}, {pipeline_mode = #tpu.pipeline_mode<synchronous>, transform_indices = @transform_4, window_bounds = array<i64: 1, 128>}, {pipeline_mode = #tpu.pipeline_mode<synchronous>, transform_indices = @transform_5, window_bounds = array<i64: 128, 128>}, {pipeline_mode = #tpu.pipeline_mode<synchronous>, transform_indices = @transform_6, window_bounds = array<i64: 1, 8>}, {transform_indices = @transform_7, window_bounds = array<i64: 8, 8>}]} {
    %c0 = arith.constant 0 : index
    %c0_0 = arith.constant 0 : index
    %0 = vector.load %arg1[%c0, %c0_0] : memref<8x256xf32, #tpu.memory_space<vmem>>, vector<8x256xf32>
    %1 = arith.truncf %0 : vector<8x256xf32> to vector<8x256xbf16>
    %c0_1 = arith.constant 0 : index
    %c0_2 = arith.constant 0 : index
    %2 = vector.load %arg2[%c0_1, %c0_2] : memref<256x256xbf16, #tpu.memory_space<vmem>>, vector<256x256xbf16>
    %cst = arith.constant dense<0.000000e+00> : vector<8x256xf32>
    %3 = tpu.matmul %1, %2, %cst {dimension_numbers = #tpu.dot_dimension_numbers<[1], [0], [0], [1], [0, 0, 1, 1], [], []>} : vector<8x256xbf16>, vector<256x256xbf16>, vector<8x256xf32> -> vector<8x256xf32>
    %c0_3 = arith.constant 0 : index
    %c0_4 = arith.constant 0 : index
    %4 = vector.load %arg3[%c0_3, %c0_4] : memref<1x256xf32, #tpu.memory_space<vmem>>, vector<1x256xf32>
    %5 = vector.broadcast %4 : vector<1x256xf32> to vector<8x256xf32>
    %6 = arith.addf %3, %5 : vector<8x256xf32>
    %cst_5 = arith.constant 0.000000e+00 : f32
    %7 = vector.broadcast %cst_5 : f32 to vector<8x256xf32>
    %8 = arith.maximumf %6, %7 : vector<8x256xf32>
    %9 = arith.truncf %8 : vector<8x256xf32> to vector<8x256xbf16>
    %c0_6 = arith.constant 0 : index
    %c0_7 = arith.constant 0 : index
    %10 = vector.load %arg4[%c0_6, %c0_7] : memref<256x128xbf16, #tpu.memory_space<vmem>>, vector<256x128xbf16>
    %cst_8 = arith.constant dense<0.000000e+00> : vector<8x128xf32>
    %11 = tpu.matmul %9, %10, %cst_8 {dimension_numbers = #tpu.dot_dimension_numbers<[1], [0], [0], [1], [0, 0, 1, 1], [], []>} : vector<8x256xbf16>, vector<256x128xbf16>, vector<8x128xf32> -> vector<8x128xf32>
    %c0_9 = arith.constant 0 : index
    %c0_10 = arith.constant 0 : index
    %12 = vector.load %arg5[%c0_9, %c0_10] : memref<1x128xf32, #tpu.memory_space<vmem>>, vector<1x128xf32>
    %13 = vector.broadcast %12 : vector<1x128xf32> to vector<8x128xf32>
    %14 = arith.addf %11, %13 : vector<8x128xf32>
    %cst_11 = arith.constant 0.000000e+00 : f32
    %15 = vector.broadcast %cst_11 : f32 to vector<8x128xf32>
    %16 = arith.maximumf %14, %15 : vector<8x128xf32>
    %17 = arith.truncf %16 : vector<8x128xf32> to vector<8x128xbf16>
    %c0_12 = arith.constant 0 : index
    %c0_13 = arith.constant 0 : index
    %18 = vector.load %arg6[%c0_12, %c0_13] : memref<128x128xbf16, #tpu.memory_space<vmem>>, vector<128x128xbf16>
    %cst_14 = arith.constant dense<0.000000e+00> : vector<8x128xf32>
    %19 = tpu.matmul %17, %18, %cst_14 {dimension_numbers = #tpu.dot_dimension_numbers<[1], [0], [0], [1], [0, 0, 1, 1], [], []>} : vector<8x128xbf16>, vector<128x128xbf16>, vector<8x128xf32> -> vector<8x128xf32>
    %20 = vector.extract_strided_slice %19 {offsets = [0, 0], sizes = [8, 8], strides = [1, 1]} : vector<8x128xf32> to vector<8x8xf32>
    %c0_15 = arith.constant 0 : index
    %c0_16 = arith.constant 0 : index
    %21 = vector.load %arg7[%c0_15, %c0_16] : memref<1x8xf32, #tpu.memory_space<vmem>>, vector<1x8xf32>
    %22 = vector.broadcast %21 : vector<1x8xf32> to vector<8x8xf32>
    %23 = arith.addf %20, %22 : vector<8x8xf32>
    %c0_17 = arith.constant 0 : index
    %c0_18 = arith.constant 0 : index
    %24 = vector.load %arg8[%c0_17, %c0_18] : memref<8x8xf32, #tpu.memory_space<vmem>>, vector<8x8xf32>
    tpu.vector_store %arg8[%c0_17, %c0_18], %23 {strides = array<i32>} : memref<8x8xf32, #tpu.memory_space<vmem>>, vector<8x8xf32>,
    return
  }
  func.func @transform_0(%arg0: i32) -> (i32, i32) {
    %c0_i32 = arith.constant 0 : i32
    %c0_i32_0 = arith.constant 0 : i32
    return %arg0, %c0_i32 : i32, i32
  }
  func.func @transform_1(%arg0: i32) -> (i32, i32) {
    %c0_i32 = arith.constant 0 : i32
    %c0_i32_0 = arith.constant 0 : i32
    %c0_i32_1 = arith.constant 0 : i32
    return %c0_i32, %c0_i32_0 : i32, i32
  }
  func.func @transform_2(%arg0: i32) -> (i32, i32) {
    %c0_i32 = arith.constant 0 : i32
    %c0_i32_0 = arith.constant 0 : i32
    %c0_i32_1 = arith.constant 0 : i32
    return %c0_i32, %c0_i32_0 : i32, i32
  }
  func.func @transform_3(%arg0: i32) -> (i32, i32) {
    %c0_i32 = arith.constant 0 : i32
    %c0_i32_0 = arith.constant 0 : i32
    %c0_i32_1 = arith.constant 0 : i32
    return %c0_i32, %c0_i32_0 : i32, i32
  }
  func.func @transform_4(%arg0: i32) -> (i32, i32) {
    %c0_i32 = arith.constant 0 : i32
    %c0_i32_0 = arith.constant 0 : i32
    %c0_i32_1 = arith.constant 0 : i32
    return %c0_i32, %c0_i32_0 : i32, i32
  }
  func.func @transform_5(%arg0: i32) -> (i32, i32) {
    %c0_i32 = arith.constant 0 : i32
    %c0_i32_0 = arith.constant 0 : i32
    %c0_i32_1 = arith.constant 0 : i32
    return %c0_i32, %c0_i32_0 : i32, i32
  }
  func.func @transform_6(%arg0: i32) -> (i32, i32) {
    %c0_i32 = arith.constant 0 : i32
    %c0_i32_0 = arith.constant 0 : i32
    %c0_i32_1 = arith.constant 0 : i32
    return %c0_i32, %c0_i32_0 : i32, i32
  }
  func.func @transform_7(%arg0: i32) -> (i32, i32) {
    %c0_i32 = arith.constant 0 : i32
    %c0_i32_0 = arith.constant 0 : i32
    return %arg0, %c0_i32 : i32, i32
  }
}

</mosaic_0001>

<llo_original>
// kernel: domain_classifier.1
$region0: #{domain_classifier.1}
  #allocation0 [shape = 'u32[]', space=smem, size = 0x4, offset = 0x4, fixed_abs, tag = 'smem constant byte address 0x4 - core index']
  #allocation1 [shape = 'u32[144,128]{1,0:T(1,128)}', space=vmem, size = 0x12000, scoped, tag = 'internal scratch']
  %s0 = inlined_call_operand.vmem [shape: f32[8,256], index: 0, kind: input, shape index: {}]
  %s1 = inlined_call_operand.vmem [shape: bf16[256,256], index: 1, kind: input, shape index: {}]
  %s2 = inlined_call_operand.vmem [shape: f32[1,256], index: 2, kind: input, shape index: {}]
  %s3 = inlined_call_operand.vmem [shape: bf16[256,128], index: 3, kind: input, shape index: {}]
  %s4 = inlined_call_operand.vmem [shape: f32[1,128], index: 4, kind: input, shape index: {}]
  %s5 = inlined_call_operand.vmem [shape: bf16[128,128], index: 5, kind: input, shape index: {}]
  %s6 = inlined_call_operand.vmem [shape: f32[1,8], index: 6, kind: input, shape index: {}]
  %s7 = inlined_call_operand.vmem [shape: f32[8,8], index: 7, kind: output, shape index: {}]
  %s8 = sld [smem:[#allocation0]]
  $region38: #{domain_classifier.1} parent=0
    _
  %s10 = ssub.s32 1, %s8
  %s11 = scalar_select 0, %s10, %s8
  // Predicated region
  $region2: #{domain_classifier.1} parent=0 // pred_check
    _
  $region3: #{domain_classifier.1} parent=0 // pred_check_branch
    %13 = sbr.rel (0) target = $region5
  $region4: #{domain_classifier.1} parent=0 // pred_region
    _
  $region5: #{domain_classifier.1} parent=0 // pred_fallthru
    _
  // Predicated region
  $region6: #{domain_classifier.1} parent=0 // pred_check
    _
  $region7: #{domain_classifier.1} parent=0 // pred_check_branch
    %15 = sbr.rel (0) target = $region9
  $region8: #{domain_classifier.1} parent=0 // pred_region
    _
  $region9: #{domain_classifier.1} parent=0 // pred_fallthru
    _
  // Predicated region
  $region10: #{domain_classifier.1} parent=0 // pred_check
    _
  $region11: #{domain_classifier.1} parent=0 // pred_check_branch
    %17 = sbr.rel (0) target = $region13
  $region12: #{domain_classifier.1} parent=0 // pred_region
    _
  $region13: #{domain_classifier.1} parent=0 // pred_fallthru
    _
  // Predicated region
  $region14: #{domain_classifier.1} parent=0 // pred_check
    _
  $region15: #{domain_classifier.1} parent=0 // pred_check_branch
    %19 = sbr.rel (0) target = $region17
  $region16: #{domain_classifier.1} parent=0 // pred_region
    _
  $region17: #{domain_classifier.1} parent=0 // pred_fallthru
    _
  // Predicated region
  $region18: #{domain_classifier.1} parent=0 // pred_check
    _
  $region19: #{domain_classifier.1} parent=0 // pred_check_branch
    %21 = sbr.rel (0) target = $region21
  $region20: #{domain_classifier.1} parent=0 // pred_region
    _
  $region21: #{domain_classifier.1} parent=0 // pred_fallthru
    _
  // Predicated region
  $region22: #{domain_classifier.1} parent=0 // pred_check
    _
  $region23: #{domain_classifier.1} parent=0 // pred_check_branch
    %23 = sbr.rel (0) target = $region25
  $region24: #{domain_classifier.1} parent=0 // pred_region
    _
  $region25: #{domain_classifier.1} parent=0 // pred_fallthru
    _
  // Predicated region
  $region26: #{domain_classifier.1} parent=0 // pred_check
    _
  $region27: #{domain_classifier.1} parent=0 // pred_check_branch
    %25 = sbr.rel (0) target = $region29
  $region28: #{domain_classifier.1} parent=0 // pred_region
    _
  $region29: #{domain_classifier.1} parent=0 // pred_fallthru
    _
  %v27 = vld [vmem:[%s0] sm:$0xff]
  %v28 = vld [vmem:[%s0 + $0x8] sm:$0xff]
  %v29 = vpack.c.bf16 %v27, %v27
  %v30 = vpack.c.bf16 %v28, %v28
  %v31 = vld [vmem:[%s1] sm:$0xff]
  %v32 = vld [vmem:[%s1 + $0x8] sm:$0xff]
  %v33 = vld [vmem:[%s1 + $0x10] sm:$0xff]
  %v34 = vld [vmem:[%s1 + $0x18] sm:$0xff]
  %v35 = vld [vmem:[%s1 + $0x20] sm:$0xff]
  %v36 = vld [vmem:[%s1 + $0x28] sm:$0xff]
  %v37 = vld [vmem:[%s1 + $0x30] sm:$0xff]
  %v38 = vld [vmem:[%s1 + $0x38] sm:$0xff]
  %v39 = vld [vmem:[%s1 + $0x40] sm:$0xff]
  %v40 = vld [vmem:[%s1 + $0x48] sm:$0xff]
  %v41 = vld [vmem:[%s1 + $0x50] sm:$0xff]
  %v42 = vld [vmem:[%s1 + $0x58] sm:$0xff]
  %v43 = vld [vmem:[%s1 + $0x60] sm:$0xff]
  %v44 = vld [vmem:[%s1 + $0x68] sm:$0xff]
  %v45 = vld [vmem:[%s1 + $0x70] sm:$0xff]
  %v46 = vld [vmem:[%s1 + $0x78] sm:$0xff]
  %v47 = vld [vmem:[%s1 + $0x80] sm:$0xff]
  %v48 = vld [vmem:[%s1 + $0x88] sm:$0xff]
  %v49 = vld [vmem:[%s1 + $0x90] sm:$0xff]
  %v50 = vld [vmem:[%s1 + $0x98] sm:$0xff]
  %v51 = vld [vmem:[%s1 + $0xa0] sm:$0xff]
  %v52 = vld [vmem:[%s1 + $0xa8] sm:$0xff]
  %v53 = vld [vmem:[%s1 + $0xb0] sm:$0xff]
  %v54 = vld [vmem:[%s1 + $0xb8] sm:$0xff]
  %v55 = vld [vmem:[%s1 + $0xc0] sm:$0xff]
  %v56 = vld [vmem:[%s1 + $0xc8] sm:$0xff]
  %v57 = vld [vmem:[%s1 + $0xd0] sm:$0xff]
  %v58 = vld [vmem:[%s1 + $0xd8] sm:$0xff]
  %v59 = vld [vmem:[%s1 + $0xe0] sm:$0xff]
  %v60 = vld [vmem:[%s1 + $0xe8] sm:$0xff]
  %v61 = vld [vmem:[%s1 + $0xf0] sm:$0xff]
  %v62 = vld [vmem:[%s1 + $0xf8] sm:$0xff]
  %v63 = vld [vmem:[%s2] sm:$0x3]
  %v65 = vlaneseq
  %v66 = vshrl.u32 %v65, 7
  %v67 = vsub.s32 0, %v66
  %v68 = vrot.slane %v63, %v67
  %v69 = vlaneseq
  %v70 = vshrl.u32 %v69, 7
  %v71 = vsub.s32 1, %v70
  %v72 = vrot.slane %v63, %v71
  %v107 = vunpack.c.l.b16 %v31
  %v108 = vunpack.c.h.b16 %v31
  %v109 = vunpack.c.l.b16 %v32
  %v110 = vunpack.c.h.b16 %v32
  %v111 = vunpack.c.l.b16 %v33
  %v112 = vunpack.c.h.b16 %v33
  %v113 = vunpack.c.l.b16 %v34
  %v114 = vunpack.c.h.b16 %v34
  %v115 = vunpack.c.l.b16 %v35
  %v116 = vunpack.c.h.b16 %v35
  %v117 = vunpack.c.l.b16 %v36
  %v118 = vunpack.c.h.b16 %v36
  %v119 = vunpack.c.l.b16 %v37
  %v120 = vunpack.c.h.b16 %v37
  %v121 = vunpack.c.l.b16 %v38
  %v122 = vunpack.c.h.b16 %v38
  %v123 = vunpack.c.l.b16 %v39
  %v124 = vunpack.c.h.b16 %v39
  %v125 = vunpack.c.l.b16 %v40
  %v126 = vunpack.c.h.b16 %v40
  %v127 = vunpack.c.l.b16 %v41
  %v128 = vunpack.c.h.b16 %v41
  %v129 = vunpack.c.l.b16 %v42
  %v130 = vunpack.c.h.b16 %v42
  %v131 = vunpack.c.l.b16 %v43
  %v132 = vunpack.c.h.b16 %v43
  %v133 = vunpack.c.l.b16 %v44
  %v134 = vunpack.c.h.b16 %v44
  %v135 = vunpack.c.l.b16 %v45
  %v136 = vunpack.c.h.b16 %v45
  %v137 = vunpack.c.l.b16 %v46
  %v138 = vunpack.c.h.b16 %v46
  %v139 = vunpack.c.l.b16 %v47
  %v140 = vunpack.c.h.b16 %v47
  %v141 = vunpack.c.l.b16 %v48
  %v142 = vunpack.c.h.b16 %v48
  %v143 = vunpack.c.l.b16 %v49
  %v144 = vunpack.c.h.b16 %v49
  %v145 = vunpack.c.l.b16 %v50
  %v146 = vunpack.c.h.b16 %v50
  %v147 = vunpack.c.l.b16 %v51
  %v148 = vunpack.c.h.b16 %v51
  %v149 = vunpack.c.l.b16 %v52
  %v150 = vunpack.c.h.b16 %v52
  %v151 = vunpack.c.l.b16 %v53
  %v152 = vunpack.c.h.b16 %v53
  %v153 = vunpack.c.l.b16 %v54
  %v154 = vunpack.c.h.b16 %v54
  %v155 = vunpack.c.l.b16 %v55
  %v156 = vunpack.c.h.b16 %v55
  %v157 = vunpack.c.l.b16 %v56
  %v158 = vunpack.c.h.b16 %v56
  %v159 = vunpack.c.l.b16 %v57
  %v160 = vunpack.c.h.b16 %v57
  %v161 = vunpack.c.l.b16 %v58
  %v162 = vunpack.c.h.b16 %v58
  %v163 = vunpack.c.l.b16 %v59
  %v164 = vunpack.c.h.b16 %v59
  %v165 = vunpack.c.l.b16 %v60
  %v166 = vunpack.c.h.b16 %v60
  %v167 = vunpack.c.l.b16 %v61
  %v168 = vunpack.c.h.b16 %v61
  %v169 = vunpack.c.l.b16 %v62
  %v170 = vunpack.c.h.b16 %v62
  %v171 = vpack.c.b16 %v109, %v107
  %v172 = vpack.c.b16 %v110, %v108
  %v173 = vpack.c.b16 %v113, %v111
  %v174 = vpack.c.b16 %v114, %v112
  %v175 = vpack.c.b16 %v117, %v115
  %v176 = vpack.c.b16 %v118, %v116
  %v177 = vpack.c.b16 %v121, %v119
  %v178 = vpack.c.b16 %v122, %v120
  %v179 = vpack.c.b16 %v125, %v123
  %v180 = vpack.c.b16 %v126, %v124
  %v181 = vpack.c.b16 %v129, %v127
  %v182 = vpack.c.b16 %v130, %v128
  %v183 = vpack.c.b16 %v133, %v131
  %v184 = vpack.c.b16 %v134, %v132
  %v185 = vpack.c.b16 %v137, %v135
  %v186 = vpack.c.b16 %v138, %v136
  %v187 = vpack.c.b16 %v141, %v139
  %v188 = vpack.c.b16 %v142, %v140
  %v189 = vpack.c.b16 %v145, %v143
  %v190 = vpack.c.b16 %v146, %v144
  %v191 = vpack.c.b16 %v149, %v147
  %v192 = vpack.c.b16 %v150, %v148
  %v193 = vpack.c.b16 %v153, %v151
  %v194 = vpack.c.b16 %v154, %v152
  %v195 = vpack.c.b16 %v157, %v155
  %v196 = vpack.c.b16 %v158, %v156
  %v197 = vpack.c.b16 %v161, %v159
  %v198 = vpack.c.b16 %v162, %v160
  %v199 = vpack.c.b16 %v165, %v163
  %v200 = vpack.c.b16 %v166, %v164
  %v201 = vpack.c.b16 %v169, %v167
  %v202 = vpack.c.b16 %v170, %v168
  %235 = vmatprep.subr.bf16.mxu0 %v172
  %236 = vmatpush1.bf16.msra.mxu0 %v171
  %237 = vmatprep.subr.bf16.mxu0 %v174
  %238 = vmatpush1.bf16.msra.mxu0 %v173
  %239 = vmatprep.subr.bf16.mxu0 %v176
  %240 = vmatpush1.bf16.msra.mxu0 %v175
  %241 = vmatprep.subr.bf16.mxu0 %v178
  %242 = vmatpush1.bf16.msra.mxu0 %v177
  %243 = vmatprep.subr.bf16.mxu0 %v180
  %244 = vmatpush1.bf16.msra.mxu0 %v179
  %245 = vmatprep.subr.bf16.mxu0 %v182
  %246 = vmatpush1.bf16.msra.mxu0 %v181
  %247 = vmatprep.subr.bf16.mxu0 %v184
  %248 = vmatpush1.bf16.msra.mxu0 %v183
  %249 = vmatprep.subr.bf16.mxu0 %v186
  %250 = vmatpush1.bf16.msra.mxu0 %v185
  %251 = vmatprep.subr.bf16.mxu0 %v188
  %252 = vmatpush1.bf16.msra.mxu0 %v187
  %253 = vmatprep.subr.bf16.mxu0 %v190
  %254 = vmatpush1.bf16.msra.mxu0 %v189
  %255 = vmatprep.subr.bf16.mxu0 %v192
  %256 = vmatpush1.bf16.msra.mxu0 %v191
  %257 = vmatprep.subr.bf16.mxu0 %v194
  %258 = vmatpush1.bf16.msra.mxu0 %v193
  %259 = vmatprep.subr.bf16.mxu0 %v196
  %260 = vmatpush1.bf16.msra.mxu0 %v195
  %261 = vmatprep.subr.bf16.mxu0 %v198
  %262 = vmatpush1.bf16.msra.mxu0 %v197
  %263 = vmatprep.subr.bf16.mxu0 %v200
  %264 = vmatpush1.bf16.msra.mxu0 %v199
  %265 = vmatprep.subr.bf16.mxu0 %v202
  %266 = vmatpush1.bf16.msra.mxu0 %v201
  %267 = vmatprep.mubr.bf16.mxu0 %v30
  %268 = vmatmul.mubr.bf16.gmra.mrb[0].mxu0 %v29
  %v269 = vpop.f32.mrb[0].mxu0
  %v270 = vadd.f32 %v68, %v269
  %v271 = vpop.f32.mrb[0].mxu0
  %v272 = vadd.f32 %v72, %v271
  %v273 = vpop.f32.mrb[0].mxu0
  %v274 = vpop.f32.mrb[0].mxu0
  %275 = vdwg.mxu0
  %v276 = vmax.f32 %v270, 0.0
  %v277 = vmax.f32 %v272, 0.0
  %v278 = vpack.c.bf16 %v276, %v276
  %v279 = vpack.c.bf16 %v277, %v277
  %v280 = vld [vmem:[%s3] sm:$0xf]
  %v281 = vld [vmem:[%s3 + $0x4] sm:$0xf]
  %v282 = vld [vmem:[%s3 + $0x8] sm:$0xf]
  %v283 = vld [vmem:[%s3 + $0xc] sm:$0xf]
  %v284 = vld [vmem:[%s3 + $0x10] sm:$0xf]
  %v285 = vld [vmem:[%s3 + $0x14] sm:$0xf]
  %v286 = vld [vmem:[%s3 + $0x18] sm:$0xf]
  %v287 = vld [vmem:[%s3 + $0x1c] sm:$0xf]
  %v288 = vld [vmem:[%s3 + $0x20] sm:$0xf]
  %v289 = vld [vmem:[%s3 + $0x24] sm:$0xf]
  %v290 = vld [vmem:[%s3 + $0x28] sm:$0xf]
  %v291 = vld [vmem:[%s3 + $0x2c] sm:$0xf]
  %v292 = vld [vmem:[%s3 + $0x30] sm:$0xf]
  %v293 = vld [vmem:[%s3 + $0x34] sm:$0xf]
  %v294 = vld [vmem:[%s3 + $0x38] sm:$0xf]
  %v295 = vld [vmem:[%s3 + $0x3c] sm:$0xf]
  %v296 = vld [vmem:[%s3 + $0x40] sm:$0xf]
  %v297 = vld [vmem:[%s3 + $0x44] sm:$0xf]
  %v298 = vld [vmem:[%s3 + $0x48] sm:$0xf]
  %v299 = vld [vmem:[%s3 + $0x4c] sm:$0xf]
  %v300 = vld [vmem:[%s3 + $0x50] sm:$0xf]
  %v301 = vld [vmem:[%s3 + $0x54] sm:$0xf]
  %v302 = vld [vmem:[%s3 + $0x58] sm:$0xf]
  %v303 = vld [vmem:[%s3 + $0x5c] sm:$0xf]
  %v304 = vld [vmem:[%s3 + $0x60] sm:$0xf]
  %v305 = vld [vmem:[%s3 + $0x64] sm:$0xf]
  %v306 = vld [vmem:[%s3 + $0x68] sm:$0xf]
  %v307 = vld [vmem:[%s3 + $0x6c] sm:$0xf]
  %v308 = vld [vmem:[%s3 + $0x70] sm:$0xf]
  %v309 = vld [vmem:[%s3 + $0x74] sm:$0xf]
  %v310 = vld [vmem:[%s3 + $0x78] sm:$0xf]
  %v311 = vld [vmem:[%s3 + $0x7c] sm:$0xf]
  %v312 = vld [vmem:[%s4] sm:$0x1]
  %v314 = vlaneseq
  %v315 = vshrl.u32 %v314, 7
  %v316 = vsub.s32 0, %v315
  %v317 = vrot.slane %v312, %v316
  %v351 = vunpack.c.l.b16 %v280
  %v352 = vunpack.c.l.b16 %v281
  %v353 = vunpack.c.l.b16 %v282
  %v354 = vunpack.c.l.b16 %v283
  %v355 = vunpack.c.l.b16 %v284
  %v356 = vunpack.c.l.b16 %v285
  %v357 = vunpack.c.l.b16 %v286
  %v358 = vunpack.c.l.b16 %v287
  %v359 = vunpack.c.l.b16 %v288
  %v360 = vunpack.c.l.b16 %v289
  %v361 = vunpack.c.l.b16 %v290
  %v362 = vunpack.c.l.b16 %v291
  %v363 = vunpack.c.l.b16 %v292
  %v364 = vunpack.c.l.b16 %v293
  %v365 = vunpack.c.l.b16 %v294
  %v366 = vunpack.c.l.b16 %v295
  %v367 = vunpack.c.l.b16 %v296
  %v368 = vunpack.c.l.b16 %v297
  %v369 = vunpack.c.l.b16 %v298
  %v370 = vunpack.c.l.b16 %v299
  %v371 = vunpack.c.l.b16 %v300
  %v372 = vunpack.c.l.b16 %v301
  %v373 = vunpack.c.l.b16 %v302
  %v374 = vunpack.c.l.b16 %v303
  %v375 = vunpack.c.l.b16 %v304
  %v376 = vunpack.c.l.b16 %v305
  %v377 = vunpack.c.l.b16 %v306
  %v378 = vunpack.c.l.b16 %v307
  %v379 = vunpack.c.l.b16 %v308
  %v380 = vunpack.c.l.b16 %v309
  %v381 = vunpack.c.l.b16 %v310
  %v382 = vunpack.c.l.b16 %v311
  %v383 = vpack.c.b16 %v352, %v351
  %v384 = vpack.c.b16 %v354, %v353
  %v385 = vpack.c.b16 %v356, %v355
  %v386 = vpack.c.b16 %v358, %v357
  %v387 = vpack.c.b16 %v360, %v359
  %v388 = vpack.c.b16 %v362, %v361
  %v389 = vpack.c.b16 %v364, %v363
  %v390 = vpack.c.b16 %v366, %v365
  %v391 = vpack.c.b16 %v368, %v367
  %v392 = vpack.c.b16 %v370, %v369
  %v393 = vpack.c.b16 %v372, %v371
  %v394 = vpack.c.b16 %v374, %v373
  %v395 = vpack.c.b16 %v376, %v375
  %v396 = vpack.c.b16 %v378, %v377
  %v397 = vpack.c.b16 %v380, %v379
  %v398 = vpack.c.b16 %v382, %v381
  %415 = vmatprep.subr.bf16.mxu0 0
  %416 = vmatpush1.bf16.msra.mxu0 %v383
  %417 = vmatprep.subr.bf16.mxu0 0
  %418 = vmatpush1.bf16.msra.mxu0 %v384
  %419 = vmatprep.subr.bf16.mxu0 0
  %420 = vmatpush1.bf16.msra.mxu0 %v385
  %421 = vmatprep.subr.bf16.mxu0 0
  %422 = vmatpush1.bf16.msra.mxu0 %v386
  %423 = vmatprep.subr.bf16.mxu0 0
  %424 = vmatpush1.bf16.msra.mxu0 %v387
  %425 = vmatprep.subr.bf16.mxu0 0
  %426 = vmatpush1.bf16.msra.mxu0 %v388
  %427 = vmatprep.subr.bf16.mxu0 0
  %428 = vmatpush1.bf16.msra.mxu0 %v389
  %429 = vmatprep.subr.bf16.mxu0 0
  %430 = vmatpush1.bf16.msra.mxu0 %v390
  %431 = vmatprep.subr.bf16.mxu0 0
  %432 = vmatpush1.bf16.msra.mxu0 %v391
  %433 = vmatprep.subr.bf16.mxu0 0
  %434 = vmatpush1.bf16.msra.mxu0 %v392
  %435 = vmatprep.subr.bf16.mxu0 0
  %436 = vmatpush1.bf16.msra.mxu0 %v393
  %437 = vmatprep.subr.bf16.mxu0 0
  %438 = vmatpush1.bf16.msra.mxu0 %v394
  %439 = vmatprep.subr.bf16.mxu0 0
  %440 = vmatpush1.bf16.msra.mxu0 %v395
  %441 = vmatprep.subr.bf16.mxu0 0
  %442 = vmatpush1.bf16.msra.mxu0 %v396
  %443 = vmatprep.subr.bf16.mxu0 0
  %444 = vmatpush1.bf16.msra.mxu0 %v397
  %445 = vmatprep.subr.bf16.mxu0 0
  %446 = vmatpush1.bf16.msra.mxu0 %v398
  %447 = vmatprep.mubr.bf16.mxu0 %v279
  %448 = vmatmul.mubr.bf16.gmra.mrb[0].mxu0 %v278
  %v449 = vpop.f32.mrb[0].mxu0
  %v450 = vadd.f32 %v317, %v449
  %v451 = vpop.f32.mrb[0].mxu0
  %v452 = vpop.f32.mrb[0].mxu0
  %v453 = vpop.f32.mrb[0].mxu0
  %454 = vdwg.mxu0
  %v455 = vmax.f32 %v450, 0.0
  %v456 = vpack.c.bf16 %v455, %v455
  %v457 = vld [vmem:[%s5] sm:$0xf]
  %v458 = vld [vmem:[%s5 + $0x4] sm:$0xf]
  %v459 = vld [vmem:[%s5 + $0x8] sm:$0xf]
  %v460 = vld [vmem:[%s5 + $0xc] sm:$0xf]
  %v461 = vld [vmem:[%s5 + $0x10] sm:$0xf]
  %v462 = vld [vmem:[%s5 + $0x14] sm:$0xf]
  %v463 = vld [vmem:[%s5 + $0x18] sm:$0xf]
  %v464 = vld [vmem:[%s5 + $0x1c] sm:$0xf]
  %v465 = vld [vmem:[%s5 + $0x20] sm:$0xf]
  %v466 = vld [vmem:[%s5 + $0x24] sm:$0xf]
  %v467 = vld [vmem:[%s5 + $0x28] sm:$0xf]
  %v468 = vld [vmem:[%s5 + $0x2c] sm:$0xf]
  %v469 = vld [vmem:[%s5 + $0x30] sm:$0xf]
  %v470 = vld [vmem:[%s5 + $0x34] sm:$0xf]
  %v471 = vld [vmem:[%s5 + $0x38] sm:$0xf]
  %v472 = vld [vmem:[%s5 + $0x3c] sm:$0xf]
  %v489 = vunpack.c.l.b16 %v457
  %v490 = vunpack.c.l.b16 %v458
  %v491 = vunpack.c.l.b16 %v459
  %v492 = vunpack.c.l.b16 %v460
  %v493 = vunpack.c.l.b16 %v461
  %v494 = vunpack.c.l.b16 %v462
  %v495 = vunpack.c.l.b16 %v463
  %v496 = vunpack.c.l.b16 %v464
  %v497 = vunpack.c.l.b16 %v465
  %v498 = vunpack.c.l.b16 %v466
  %v499 = vunpack.c.l.b16 %v467
  %v500 = vunpack.c.l.b16 %v468
  %v501 = vunpack.c.l.b16 %v469
  %v502 = vunpack.c.l.b16 %v470
  %v503 = vunpack.c.l.b16 %v471
  %v504 = vunpack.c.l.b16 %v472
  %v505 = vpack.c.b16 %v490, %v489
  %v506 = vpack.c.b16 %v492, %v491
  %v507 = vpack.c.b16 %v494, %v493
  %v508 = vpack.c.b16 %v496, %v495
  %v509 = vpack.c.b16 %v498, %v497
  %v510 = vpack.c.b16 %v500, %v499
  %v511 = vpack.c.b16 %v502, %v501
  %v512 = vpack.c.b16 %v504, %v503
  %521 = vmatprep.subr.bf16.mxu0 0
  %522 = vmatpush1.bf16.msra.mxu0 %v505
  %523 = vmatprep.subr.bf16.mxu0 0
  %524 = vmatpush1.bf16.msra.mxu0 %v506
  %525 = vmatprep.subr.bf16.mxu0 0
  %526 = vmatpush1.bf16.msra.mxu0 %v507
  %527 = vmatprep.subr.bf16.mxu0 0
  %528 = vmatpush1.bf16.msra.mxu0 %v508
  %529 = vmatprep.subr.bf16.mxu0 0
  %530 = vmatpush1.bf16.msra.mxu0 %v509
  %531 = vmatprep.subr.bf16.mxu0 0
  %532 = vmatpush1.bf16.msra.mxu0 %v510
  %533 = vmatprep.subr.bf16.mxu0 0
  %534 = vmatpush1.bf16.msra.mxu0 %v511
  %535 = vmatprep.subr.bf16.mxu0 0
  %536 = vmatpush1.bf16.msra.mxu0 %v512
  %537 = vmatprep.subr.bf16.mxu0 0
  %538 = vmatpush1.bf16.msra.mxu0 0
  %539 = vmatprep.subr.bf16.mxu0 0
  %540 = vmatpush1.bf16.msra.mxu0 0
  %541 = vmatprep.subr.bf16.mxu0 0
  %542 = vmatpush1.bf16.msra.mxu0 0
  %543 = vmatprep.subr.bf16.mxu0 0
  %544 = vmatpush1.bf16.msra.mxu0 0
  %545 = vmatprep.subr.bf16.mxu0 0
  %546 = vmatpush1.bf16.msra.mxu0 0
  %547 = vmatprep.subr.bf16.mxu0 0
  %548 = vmatpush1.bf16.msra.mxu0 0
  %549 = vmatprep.subr.bf16.mxu0 0
  %550 = vmatpush1.bf16.msra.mxu0 0
  %551 = vmatprep.subr.bf16.mxu0 0
  %552 = vmatpush1.bf16.msra.mxu0 0
  %553 = vmatprep.mubr.bf16.mxu0 0
  %554 = vmatmul.mubr.bf16.gmra.mrb[0].mxu0 %v456
  %v555 = vpop.f32.mrb[0].mxu0
  %v556 = vadd.f32 0.0, %v555
  %v557 = vpop.f32.mrb[0].mxu0
  %v558 = vpop.f32.mrb[0].mxu0
  %v559 = vpop.f32.mrb[0].mxu0
  %560 = vdwg.mxu0
  %v561 = vld [vmem:[%s6] sm:$0x1]
  %v563 = vlaneseq
  %v564 = vshrl.u32 %v563, 7
  %v565 = vsub.s32 0, %v564
  %v566 = vrot.slane %v561, %v565
  %v568 = vadd.f32 %v556, %v566
  %vm569 = vcmask 64512
  %570 = vst.msk [vmem:[%s7] sm:$0xff] %vm569, %v568
  // Predicated region
  $region30: #{domain_classifier.1} parent=0 // pred_check
    _
  $region31: #{domain_classifier.1} parent=0 // pred_check_branch
    %572 = sbr.rel (0) target = $region33
  $region32: #{domain_classifier.1} parent=0 // pred_region
    _
  $region33: #{domain_classifier.1} parent=0 // pred_fallthru
    _
  // Predicated region
  $region34: #{domain_classifier.1} parent=0 // pred_check
    _
  $region35: #{domain_classifier.1} parent=0 // pred_check_branch
    %574 = sbr.rel (0) target = $region37
  $region36: #{domain_classifier.1} parent=0 // pred_region
    _
  $region37: #{domain_classifier.1} parent=0 // pred_fallthru
    _

</llo_original>
